<compile_context>
chip_gen: v6e
topology: v6e:2x2x1
jax: 0.10.0
libtpu: 0.0.40
codegen_flags: <defaults>
</compile_context>

<pallas_src>
import jax
import jax.numpy as jnp
from jax.experimental import pallas as pl
from jax.experimental.pallas import tpu as pltpu


def _pick_spatial_tile(hw, fp, itemsize, max_block_bytes=1 << 20):
    """Largest multiple-of-128 tile that divides hw and keeps one (fp, T) block small."""
    if hw % 128 != 0:
        return hw  # full spatial extent: block dim == array dim satisfies the tiling rule
    cap = (max_block_bytes // max(1, fp * itemsize)) // 128 * 128
    cap = max(128, min(hw, cap))
    for t in range(cap, 127, -128):
        if hw % t == 0:
            return t
    return hw


def _make_pool_kernel(feat_nums, fp):
    """Sum x over the spatial (lane) axis into a per-batch (C, 1) f32 accumulator."""

    def pool_kernel(*refs):
        xs = refs[:feat_nums]
        out_ref = refs[feat_nums]          # (1, C, 1) f32, resident across the t axis

        @pl.when(pl.program_id(1) == 0)
        def _():
            out_ref[...] = jnp.zeros_like(out_ref)

        for i, x_ref in enumerate(xs):     # static unroll over input groups
            part = jnp.sum(x_ref[0].astype(jnp.float32), axis=-1, keepdims=True)  # (fp, 1)
            out_ref[0, i * fp:(i + 1) * fp, :] += part

    return pool_kernel


def _make_reweight_kernel(feat_nums, fp):
    """out = sum_i  x_i * weights[group i]  on one (fp, T) spatial tile."""

    def reweight_kernel(w_ref, *refs):
        xs = refs[:feat_nums]
        o_ref = refs[feat_nums]            # (1, fp, T)

        acc = xs[0][0].astype(jnp.float32) * w_ref[0, 0:fp, :]          # (fp, T) * (fp, 1)
        for i in range(1, feat_nums):      # static unroll over channel groups
            acc = acc + xs[i][0].astype(jnp.float32) * w_ref[0, i * fp:(i + 1) * fp, :]
        o_ref[0] = acc.astype(o_ref.dtype)

    return reweight_kernel


def noconvex_self_learned_fusion(xs, w1, b1, w2, b2):
    """xs: list of feat_nums arrays, each (B, feat_planes, H, W) NCHW (like PyTorch).
    w1: (mid, C), b1: (mid,), w2: (C, mid), b2: (C,)   -- 1x1 conv params (flattened).
    Returns (B, feat_planes, H, W).
    """
    feat_nums = len(xs)
    B, fp, H, W = xs[0].shape
    C = fp * feat_nums
    HW = H * W
    dtype = xs[0].dtype

    # Free reshapes: keep NCHW, fuse spatial dims onto the lane axis.
    xf = [x.reshape(B, fp, HW) for x in xs]

    T = _pick_spatial_tile(HW, fp, jnp.dtype(dtype).itemsize)
    n_t = HW // T

    # ---- Pass 1: global average pool (sum here; the 1/HW scale is folded into w1) ----
    pooled = pl.pallas_call(
        _make_pool_kernel(feat_nums, fp),
        out_shape=jax.ShapeDtypeStruct((B, C, 1), jnp.float32),
        grid_spec=pltpu.PrefetchScalarGridSpec(
            num_scalar_prefetch=0,
            grid=(B, n_t),
            in_specs=[pl.BlockSpec((1, fp, T), lambda b, t: (b, 0, t))
                      for _ in range(feat_nums)],
            out_specs=pl.BlockSpec((1, C, 1), lambda b, t: (b, 0, 0)),
        ),
        compiler_params=pltpu.CompilerParams(
            dimension_semantics=("parallel", "arbitrary")),
    )(*xf)

    # ---- SE MLP for all B at once (tiny: M=B, K/N=mid). Fold 1/HW into w1. ----
    pooled2d = pooled[:, :, 0]                                       # (B, C) f32
    h = jax.nn.relu(pooled2d @ (w1.T.astype(jnp.float32) * (1.0 / HW)) + b1)
    weights = jax.nn.sigmoid(h @ w2.T.astype(jnp.float32) + b2)      # (B, C) f32
    weights = weights[:, :, None]                                    # (B, C, 1)

    # ---- Pass 2: reweight + group-sum, tiled over (batch, spatial) ----
    out = pl.pallas_call(
        _make_reweight_kernel(feat_nums, fp),
        out_shape=jax.ShapeDtypeStruct((B, fp, HW), dtype),
        grid_spec=pltpu.PrefetchScalarGridSpec(
            num_scalar_prefetch=0,
            grid=(B, n_t),
            in_specs=[pl.BlockSpec((1, C, 1), lambda b, t: (b, 0, 0))] +
                     [pl.BlockSpec((1, fp, T), lambda b, t: (b, 0, t))
                      for _ in range(feat_nums)],
            out_specs=pl.BlockSpec((1, fp, T), lambda b, t: (b, 0, t)),
        ),
        compiler_params=pltpu.CompilerParams(
            dimension_semantics=("parallel", "parallel")),
    )(weights, *xf)

    return out.reshape(B, fp, H, W)


def ref_forward(xs, w1, b1, w2, b2):
    """Pure-JAX reference mirroring the PyTorch module."""
    feat_nums = len(xs)
    xc = jnp.concatenate(xs, axis=1)                 # (B, C, H, W)
    B, C, H, W = xc.shape
    pooled = jnp.mean(xc, axis=(2, 3))               # (B, C)
    h = jax.nn.relu(pooled @ w1.T + b1)              # (B, mid)
    wts = jax.nn.sigmoid(h @ w2.T + b2)              # (B, C)
    weighted = xc * wts[:, :, None, None]
    return weighted.reshape(B, feat_nums, C // feat_nums, H, W).sum(axis=1)


if __name__ == "__main__":
    # Small but module-consistent shapes: feat_planes=64, feat_nums=2, reduction=16
    B, feat_planes, feat_nums, reduction = 2, 64, 2, 16
    H = W = 16
    C = feat_planes * feat_nums          # 128
    mid = feat_planes // reduction       # 4

    key = jax.random.PRNGKey(0)
    k1, k2, k3, k4, k5, k6 = jax.random.split(key, 6)

    x0 = jax.random.normal(k1, (B, feat_planes, H, W), jnp.float32)
    x1 = jax.random.normal(k2, (B, feat_planes, H, W), jnp.float32)

    # Deterministic synthetic parameters (Conv2d 1x1 weights flattened to (out, in)).
    w1 = jax.random.normal(k3, (mid, C), jnp.float32) * 0.1
    b1 = jax.random.normal(k4, (mid,), jnp.float32) * 0.1
    w2 = jax.random.normal(k5, (C, mid), jnp.float32) * 0.1
    b2 = jax.random.normal(k6, (C,), jnp.float32) * 0.1

    out = noconvex_self_learned_fusion([x0, x1], w1, b1, w2, b2)
    out = jax.block_until_ready(out)

    ref = ref_forward([x0, x1], w1, b1, w2, b2)
    assert out.shape == (B, feat_planes, H, W)
    assert jnp.allclose(out, ref, atol=1e-4, rtol=1e-4), "mismatch vs reference"

    print("KERNEL_OK")
</pallas_src>

<mosaic_0001>
module attributes {stable_mosaic.version = 11 : i64} {
  func.func @pool_kernel(%arg0: i32, %arg1: i32, %arg2: memref<1x64x256xf32, #tpu.memory_space<vmem>>, %arg3: memref<1x64x256xf32, #tpu.memory_space<vmem>>, %arg4: memref<1x128x1xf32, #tpu.memory_space<vmem>>) attributes {dimension_semantics = [#tpu.dimension_semantics<parallel>, #tpu.dimension_semantics<arbitrary>], iteration_bounds = array<i64: 2, 1>, scalar_prefetch = 0 : i64, scratch_operands = 0 : i64, tpu.core_type = #tpu.core_type<tc>, window_params = [{transform_indices = @transform_0, window_bounds = array<i64: 1, 64, 256>}, {transform_indices = @transform_1, window_bounds = array<i64: 1, 64, 256>}, {transform_indices = @transform_2, window_bounds = array<i64: 1, 128, 1>}]} {
    %c0_i32 = arith.constant 0 : i32
    %0 = arith.cmpi eq, %arg1, %c0_i32 : i32
    %1 = arith.extui %0 : i1 to i32
    %c0_i32_0 = arith.constant 0 : i32
    %2 = arith.cmpi ne, %1, %c0_i32_0 : i32
    scf.if %2 {
      %cst_18 = arith.constant 0.000000e+00 : f32
      %23 = vector.broadcast %cst_18 : f32 to vector<1x128x1xf32>
      %c0_19 = arith.constant 0 : index
      %c0_20 = arith.constant 0 : index
      %c0_21 = arith.constant 0 : index
      %24 = vector.load %arg4[%c0_19, %c0_20, %c0_21] : memref<1x128x1xf32, #tpu.memory_space<vmem>>, vector<1x128x1xf32>
      tpu.vector_store %arg4[%c0_19, %c0_20, %c0_21], %23 {strides = array<i32>} : memref<1x128x1xf32, #tpu.memory_space<vmem>>, vector<1x128x1xf32>,
    } else {
    }
    %c0 = arith.constant 0 : index
    %c0_1 = arith.constant 0 : index
    %c0_2 = arith.constant 0 : index
    %3 = vector.load %arg2[%c0, %c0_1, %c0_2] : memref<1x64x256xf32, #tpu.memory_space<vmem>>, vector<1x64x256xf32>
    %4 = vector.shape_cast %3 : vector<1x64x256xf32> to vector<64x256xf32>
    %cst = arith.constant dense<0.000000e+00> : vector<64xf32>
    %5 = vector.multi_reduction <add>, %4, %cst [1] : vector<64x256xf32> to vector<64xf32>
    %6 = vector.shape_cast %5 : vector<64xf32> to vector<64x1xf32>
    %c0_3 = arith.constant 0 : index
    %c0_4 = arith.constant 0 : index
    %c0_5 = arith.constant 0 : index
    %7 = vector.load %arg4[%c0_3, %c0_4, %c0_5] : memref<1x128x1xf32, #tpu.memory_space<vmem>>, vector<1x64x1xf32>
    %8 = vector.shape_cast %7 : vector<1x64x1xf32> to vector<64x1xf32>
    %9 = arith.addf %8, %6 : vector<64x1xf32>
    %c0_6 = arith.constant 0 : index
    %c0_7 = arith.constant 0 : index
    %c0_8 = arith.constant 0 : index
    %10 = vector.load %arg4[%c0_6, %c0_7, %c0_8] : memref<1x128x1xf32, #tpu.memory_space<vmem>>, vector<1x64x1xf32>
    %11 = vector.shape_cast %10 : vector<1x64x1xf32> to vector<64x1xf32>
    %12 = vector.shape_cast %9 : vector<64x1xf32> to vector<1x64x1xf32>
    tpu.vector_store %arg4[%c0_6, %c0_7, %c0_8], %12 {strides = array<i32>} : memref<1x128x1xf32, #tpu.memory_space<vmem>>, vector<1x64x1xf32>,
    %c0_9 = arith.constant 0 : index
    %c0_10 = arith.constant 0 : index
    %c0_11 = arith.constant 0 : index
    %13 = vector.load %arg3[%c0_9, %c0_10, %c0_11] : memref<1x64x256xf32, #tpu.memory_space<vmem>>, vector<1x64x256xf32>
    %14 = vector.shape_cast %13 : vector<1x64x256xf32> to vector<64x256xf32>
    %cst_12 = arith.constant dense<0.000000e+00> : vector<64xf32>
    %15 = vector.multi_reduction <add>, %14, %cst_12 [1] : vector<64x256xf32> to vector<64xf32>
    %16 = vector.shape_cast %15 : vector<64xf32> to vector<64x1xf32>
    %c0_13 = arith.constant 0 : index
    %c64 = arith.constant 64 : index
    %c0_14 = arith.constant 0 : index
    %17 = vector.load %arg4[%c0_13, %c64, %c0_14] : memref<1x128x1xf32, #tpu.memory_space<vmem>>, vector<1x64x1xf32>
    %18 = vector.shape_cast %17 : vector<1x64x1xf32> to vector<64x1xf32>
    %19 = arith.addf %18, %16 : vector<64x1xf32>
    %c0_15 = arith.constant 0 : index
    %c64_16 = arith.constant 64 : index
    %c0_17 = arith.constant 0 : index
    %20 = vector.load %arg4[%c0_15, %c64_16, %c0_17] : memref<1x128x1xf32, #tpu.memory_space<vmem>>, vector<1x64x1xf32>
    %21 = vector.shape_cast %20 : vector<1x64x1xf32> to vector<64x1xf32>
    %22 = vector.shape_cast %19 : vector<64x1xf32> to vector<1x64x1xf32>
    tpu.vector_store %arg4[%c0_15, %c64_16, %c0_17], %22 {strides = array<i32>} : memref<1x128x1xf32, #tpu.memory_space<vmem>>, vector<1x64x1xf32>,
    return
  }
  func.func @transform_0(%arg0: i32, %arg1: i32) -> (i32, i32, i32) {
    %c0_i32 = arith.constant 0 : i32
    %c0_i32_0 = arith.constant 0 : i32
    return %arg0, %c0_i32, %arg1 : i32, i32, i32
  }
  func.func @transform_1(%arg0: i32, %arg1: i32) -> (i32, i32, i32) {
    %c0_i32 = arith.constant 0 : i32
    %c0_i32_0 = arith.constant 0 : i32
    return %arg0, %c0_i32, %arg1 : i32, i32, i32
  }
  func.func @transform_2(%arg0: i32, %arg1: i32) -> (i32, i32, i32) {
    %c0_i32 = arith.constant 0 : i32
    %c0_i32_0 = arith.constant 0 : i32
    %c0_i32_1 = arith.constant 0 : i32
    return %arg0, %c0_i32, %c0_i32_0 : i32, i32, i32
  }
}

</mosaic_0001>

<llo_original>
// kernel: tpu_custom_call.1
$region0: #{tpu_custom_call.1}
  #allocation0 [shape = 'u32[]', space=smem, size = 0x4, offset = 0x4, fixed_abs, tag = 'smem constant byte address 0x4 - core index']
  #allocation1 [shape = 'u32[144,128]{1,0:T(1,128)}', space=vmem, size = 0x12000, scoped, tag = 'internal scratch']
  %s0 = inlined_call_operand.hbm [shape: f32[2,64,256], index: 0, kind: input, shape index: {}]
  %s1 = inlined_call_operand.hbm [shape: f32[2,64,256], index: 1, kind: input, shape index: {}]
  %s2 = inlined_call_operand.vmem [shape: f32[2,128,1], index: 2, kind: output, shape index: {}]
  %s3 = sld [smem:[#allocation0]]
  $region53: #{tpu_custom_call.1} parent=0
    _
  %s5 = ssub.s32 1, %s3
  %s6 = scalar_select 0, %s5, %s3
  $region1: #{tpu_custom_call.1} parent=0
    #allocation2 [shape = 'u8[131072]{0}', space=vmem, size = 0x20000, scoped, tag = 'input window, operand 0']
    #allocation3 [shape = 's32[2]{0}', space=sflag, size = 0x8, scoped, tag = 'scoped memory for tpu_custom_call.1']
    #allocation4 [shape = 'u8[131072]{0}', space=vmem, size = 0x20000, scoped, tag = 'input window, operand 1']
    #allocation5 [shape = 's32[2]{0}', space=sflag, size = 0x8, scoped, tag = 'scoped memory for tpu_custom_call.1']
    %7 = vsyncpa [#allocation3], 0
    %s8 = scalar_lea.sflag [#allocation3], 1
    %9 = vsyncpa %s8, 0
    %10 = vsyncpa [#allocation5], 0
    %s11 = scalar_lea.sflag [#allocation5], 1
    %12 = vsyncpa %s11, 0
    loop: start=0, step=1, limit=4
    $region2: #{tpu_custom_call.1} parent=1 // loop_pre_header
      _
    $region3: #{tpu_custom_call.1} parent=1 // loop_header
      %s14 = sphi 0, %s18
      %p15 = scmp.ge.s32.totalorder %s14, 4
      %s21 = sphi 0, %s33
      %s22 = sphi 0, %s29
      %s23 = sphi 0, %s21
      %s24 = sphi 0, %s22
      %s25 = sphi 0, %s23
      %s26 = sphi 0, %s24
      %s38 = sphi 0, %s40
      %s41 = sphi 0, %s38
      %s42 = sphi 0, %s41
      %s58 = sphi 0, %s42
      %s66 = sphi 0, %s68
      %s69 = sphi 0, %s66
      %s70 = sphi 0, %s69
      %s86 = sphi 0, %s70
      %s92 = sphi 0, %s94
      %s95 = sphi 0, %s92
      %s96 = sphi 0, %s95
      %s112 = sphi 0, %s96
    $region4: #{tpu_custom_call.1} parent=1 // loop_header_branch
      %17 = sbr.rel (%p15) target = $region8
    $region5: #{tpu_custom_call.1} parent=1 // loop_body
      %s19 = ssub.s32 %s14, 1
      %s20 = ssub.s32 %s14, 2
      %s27 = sadd.s32 1, %s22
      %p28 = scmp.ge.s32.totalorder %s27, 1
      %s29 = scalar_select %p28, 0, %s27
      %s30 = sadd.s32 1, %s21
      %s31 = scalar_select %p28, %s30, %s21
      %p32 = scmp.ge.s32.totalorder %s31, 2
      %s33 = scalar_select %p32, 0, %s31
      %s34 = ssub.s32 %s21, %s33
      %s35 = ssub.s32 %s22, %s29
      %s36 = sor.u32 %s34, %s35
      %p37 = scmp.eq.s32.totalorder %s36, 0
      %s39 = sadd.s32 %s38, 1
      %s40 = scalar_select %p37, %s38, %s39
      %p43 = pneg %p37
      %p44 = scmp.eq.s32.totalorder %s14, 1
      %p45 = por %p43, %p44
      %p46 = scmp.ne.s32.totalorder %s38, %s41
      %p47 = scmp.eq.s32.totalorder %s14, 0
      %p48 = por %p46, %p47
      %p49 = scmp.ne.s32.totalorder %s38, %s41
      %p50 = scmp.eq.s32.totalorder %s19, 1
      %p51 = por %p49, %p50
      %p52 = scmp.ne.s32.totalorder %s41, %s42
      %p53 = scmp.eq.s32.totalorder %s19, 0
      %p54 = por %p52, %p53
      %p55 = scmp.ne.s32.totalorder %s41, %s42
      %p56 = scmp.eq.s32.totalorder %s20, 1
      %p57 = por %p55, %p56
      %p59 = scmp.ne.s32.totalorder %s42, %s58
      %p60 = scmp.eq.s32.totalorder %s20, 0
      %p61 = por %p59, %p60
      %s62 = ssub.s32 %s21, %s33
      %s63 = ssub.s32 %s22, %s29
      %s64 = sor.u32 %s62, %s63
      %p65 = scmp.eq.s32.totalorder %s64, 0
      %s67 = sadd.s32 %s66, 1
      %s68 = scalar_select %p65, %s66, %s67
      %p71 = pneg %p65
      %p72 = scmp.eq.s32.totalorder %s14, 1
      %p73 = por %p71, %p72
      %p74 = scmp.ne.s32.totalorder %s66, %s69
      %p75 = scmp.eq.s32.totalorder %s14, 0
      %p76 = por %p74, %p75
      %p77 = scmp.ne.s32.totalorder %s66, %s69
      %p78 = scmp.eq.s32.totalorder %s19, 1
      %p79 = por %p77, %p78
      %p80 = scmp.ne.s32.totalorder %s69, %s70
      %p81 = scmp.eq.s32.totalorder %s19, 0
      %p82 = por %p80, %p81
      %p83 = scmp.ne.s32.totalorder %s69, %s70
      %p84 = scmp.eq.s32.totalorder %s20, 1
      %p85 = por %p83, %p84
      %p87 = scmp.ne.s32.totalorder %s70, %s86
      %p88 = scmp.eq.s32.totalorder %s20, 0
      %p89 = por %p87, %p88
      %s90 = ssub.s32 %s21, %s33
      %p91 = scmp.eq.s32.totalorder %s90, 0
      %s93 = sadd.s32 %s92, 1
      %s94 = scalar_select %p91, %s92, %s93
      %p97 = pneg %p91
      %p98 = scmp.eq.s32.totalorder %s14, 1
      %p99 = por %p97, %p98
      %p100 = scmp.ne.s32.totalorder %s92, %s95
      %p101 = scmp.eq.s32.totalorder %s14, 0
      %p102 = por %p100, %p101
      %p103 = scmp.ne.s32.totalorder %s92, %s95
      %p104 = scmp.eq.s32.totalorder %s19, 1
      %p105 = por %p103, %p104
      %p106 = scmp.ne.s32.totalorder %s95, %s96
      %p107 = scmp.eq.s32.totalorder %s19, 0
      %p108 = por %p106, %p107
      %p109 = scmp.ne.s32.totalorder %s95, %s96
      %p110 = scmp.eq.s32.totalorder %s20, 1
      %p111 = por %p109, %p110
      %p113 = scmp.ne.s32.totalorder %s96, %s112
      %p114 = scmp.eq.s32.totalorder %s20, 0
      %p115 = por %p113, %p114
      %p116 = scmp.le.s32.totalorder 1, %s14
      %p117 = scmp.lt.s32.totalorder %s14, 3
      %p118 = pnand %p116, %p117
      %p119 = pneg %p118
      // Predicated region
      $region9: #{tpu_custom_call.1} parent=5 // pred_check
        _
      $region10: #{tpu_custom_call.1} parent=5 // pred_check_branch
        %121 = sbr.rel (%p118) target = $region12
      $region11: #{tpu_custom_call.1} parent=5 // pred_region
        %s122 = ssub.s32 %s14, 1
      $region12: #{tpu_custom_call.1} parent=5 // pred_fallthru
        _
      %p123 = scmp.lt.s32.totalorder %s14, 2
      // Predicated region
      $region13: #{tpu_custom_call.1} parent=5 // pred_check
        %p124 = pneg %p123
      $region14: #{tpu_custom_call.1} parent=5 // pred_check_branch
        %126 = sbr.rel (%p124) target = $region16
      $region15: #{tpu_custom_call.1} parent=5 // pred_region
        // Predicated region
        $region17: #{tpu_custom_call.1} parent=15 // pred_check
          %p127 = pneg %p48
        $region18: #{tpu_custom_call.1} parent=15 // pred_check_branch
          %129 = sbr.rel (%p127) target = $region20
        $region19: #{tpu_custom_call.1} parent=15 // pred_region
          %s130 = sand.u32 %s38, 1
          %s131 = scalar_lea.sflag [#allocation3], %s130
          %s132 = sand.u32 %s38, 1
          %s133 = smul.addr %s132, 128
          %s134 = scalar_lea.vmem [#allocation2], %s133
          %s135 = smul.u32 2, %s22
          %s137 = ssub.s32 2048, 2048
          %138 = vsyncadd %s131, %s137
          %s139 = smul.addr %s21, 16
          %s140 = sadd.s32 %s135, %s139
          %s141 = smul.addr %s140, 128
          %s142 = scalar_lea.hbm %s0, %s141
          %s143 = sshll.u32 %s134, 4
          %s144 = int_to_ptr.vmem [resolvable:$true] %s143
          %149 = dma.hbm_to_vmem [thread:$0]  %s142, 2048, %s144, %s131, 256, 256, 16
        $region20: #{tpu_custom_call.1} parent=15 // pred_fallthru
          _
        // Predicated region
        $region21: #{tpu_custom_call.1} parent=15 // pred_check
          %p150 = pneg %p76
        $region22: #{tpu_custom_call.1} parent=15 // pred_check_branch
          %152 = sbr.rel (%p150) target = $region24
        $region23: #{tpu_custom_call.1} parent=15 // pred_region
          %s153 = sand.u32 %s66, 1
          %s154 = scalar_lea.sflag [#allocation5], %s153
          %s155 = sand.u32 %s66, 1
          %s156 = smul.addr %s155, 128
          %s157 = scalar_lea.vmem [#allocation4], %s156
          %s158 = smul.u32 2, %s22
          %s160 = ssub.s32 2048, 2048
          %161 = vsyncadd %s154, %s160
          %s162 = smul.addr %s21, 16
          %s163 = sadd.s32 %s158, %s162
          %s164 = smul.addr %s163, 128
          %s165 = scalar_lea.hbm %s1, %s164
          %s166 = sshll.u32 %s157, 4
          %s167 = int_to_ptr.vmem [resolvable:$true] %s166
          %172 = dma.hbm_to_vmem [thread:$0]  %s165, 2048, %s167, %s154, 256, 256, 16
        $region24: #{tpu_custom_call.1} parent=15 // pred_fallthru
          _
      $region16: #{tpu_custom_call.1} parent=5 // pred_fallthru
        _
      %p173 = scmp.le.s32.totalorder 1, %s14
      %p174 = scmp.lt.s32.totalorder %s14, 3
      %p175 = pnand %p173, %p174
      %p176 = pneg %p175
      // Predicated region
      $region25: #{tpu_custom_call.1} parent=5 // pred_check
        _
      $region26: #{tpu_custom_call.1} parent=5 // pred_check_branch
        %178 = sbr.rel (%p175) target = $region28
      $region27: #{tpu_custom_call.1} parent=5 // pred_region
        %s179 = ssub.s32 %s14, 1
        %s180 = sand.u32 %s41, 1
        %s181 = scalar_lea.sflag [#allocation3], %s180
        %s182 = sand.u32 %s41, 1
        %s183 = smul.addr %s182, 128
        %s184 = scalar_lea.vmem [#allocation2], %s183
        // Predicated region
        $region29: #{tpu_custom_call.1} parent=27 // pred_check
          %p185 = pneg %p54
        $region30: #{tpu_custom_call.1} parent=27 // pred_check_branch
          %187 = sbr.rel (%p185) target = $region32
        $region31: #{tpu_custom_call.1} parent=27 // pred_region
          %188 = dma.done %s181, 2048
        $region32: #{tpu_custom_call.1} parent=27 // pred_fallthru
          _
        %s189 = sand.u32 %s69, 1
        %s190 = scalar_lea.sflag [#allocation5], %s189
        %s191 = sand.u32 %s69, 1
        %s192 = smul.addr %s191, 128
        %s193 = scalar_lea.vmem [#allocation4], %s192
        // Predicated region
        $region33: #{tpu_custom_call.1} parent=27 // pred_check
          %p194 = pneg %p82
        $region34: #{tpu_custom_call.1} parent=27 // pred_check_branch
          %196 = sbr.rel (%p194) target = $region36
        $region35: #{tpu_custom_call.1} parent=27 // pred_region
          %197 = dma.done %s190, 2048
        $region36: #{tpu_custom_call.1} parent=27 // pred_fallthru
          _
        %s198 = sand.u32 %s41, 1
        %s199 = scalar_lea.sflag [#allocation3], %s198
        %s200 = sand.u32 %s41, 1
        %s201 = smul.addr %s200, 128
        %s202 = scalar_lea.vmem [#allocation2], %s201
        %p203 = pneg %p54
        %p204 = pneg %p51
        %s205 = sand.u32 %s69, 1
        %s206 = scalar_lea.sflag [#allocation5], %s205
        %s207 = sand.u32 %s69, 1
        %s208 = smul.addr %s207, 128
        %s209 = scalar_lea.vmem [#allocation4], %s208
        %p210 = pneg %p82
        %p211 = pneg %p79
        %p212 = pneg %p108
        %p213 = pneg %p105
        %p214 = scmp.lt.s32.totalorder %s23, 1
        %s215 = scalar_select %p214, %s23, 1
        %s216 = smul.addr %s215, 16
        %s217 = smul.addr %s216, 8
        %s218 = scalar_lea.vmem %s2, %s217
        %s219 = smul.u32 2, %s24
        %s220 = smul.u32 2, %s24
        %p221 = scmp.lt.s32.totalorder %s23, 1
        %s222 = scalar_select %p221, %s23, 1
        %s223 = smul.addr %s222, 16
        %s224 = smul.addr %s223, 8
        %s225 = scalar_lea.vmem %s2, %s224
        %p226 = scmp.eq.s32.totalorder %s24, 0
        // Predicated region
        $region37: #{tpu_custom_call.1} parent=27 // pred_check
          %p227 = pneg %p226
        $region38: #{tpu_custom_call.1} parent=27 // pred_check_branch
          %229 = sbr.rel (%p227) target = $region40
        $region39: #{tpu_custom_call.1} parent=27 // pred_region
          %vm230 = vcmask 7168
          %231 = vst.msk [vmem:[%s225] sm:$0xff] %vm230, 0.0
          %232 = vst.msk [vmem:[%s225 + $0x8] sm:$0xff] %vm230, 0.0
          %233 = vst.msk [vmem:[%s225 + $0x10] sm:$0xff] %vm230, 0.0
          %234 = vst.msk [vmem:[%s225 + $0x18] sm:$0xff] %vm230, 0.0
          %235 = vst.msk [vmem:[%s225 + $0x20] sm:$0xff] %vm230, 0.0
          %236 = vst.msk [vmem:[%s225 + $0x28] sm:$0xff] %vm230, 0.0
          %237 = vst.msk [vmem:[%s225 + $0x30] sm:$0xff] %vm230, 0.0
          %238 = vst.msk [vmem:[%s225 + $0x38] sm:$0xff] %vm230, 0.0
          %239 = vst.msk [vmem:[%s225 + $0x40] sm:$0xff] %vm230, 0.0
          %240 = vst.msk [vmem:[%s225 + $0x48] sm:$0xff] %vm230, 0.0
          %241 = vst.msk [vmem:[%s225 + $0x50] sm:$0xff] %vm230, 0.0
          %242 = vst.msk [vmem:[%s225 + $0x58] sm:$0xff] %vm230, 0.0
          %243 = vst.msk [vmem:[%s225 + $0x60] sm:$0xff] %vm230, 0.0
          %244 = vst.msk [vmem:[%s225 + $0x68] sm:$0xff] %vm230, 0.0
          %245 = vst.msk [vmem:[%s225 + $0x70] sm:$0xff] %vm230, 0.0
          %246 = vst.msk [vmem:[%s225 + $0x78] sm:$0xff] %vm230, 0.0
        $region40: #{tpu_custom_call.1} parent=27 // pred_fallthru
          _
        %v247 = vld [vmem:[%s184] sm:$0xff]
        %v248 = vld [vmem:[%s184 + $0x8] sm:$0xff]
        %v249 = vld [vmem:[%s184 + $0x10] sm:$0xff]
        %v250 = vld [vmem:[%s184 + $0x18] sm:$0xff]
        %v251 = vld [vmem:[%s184 + $0x20] sm:$0xff]
        %v252 = vld [vmem:[%s184 + $0x28] sm:$0xff]
        %v253 = vld [vmem:[%s184 + $0x30] sm:$0xff]
        %v254 = vld [vmem:[%s184 + $0x38] sm:$0xff]
        %v255 = vld [vmem:[%s184 + $0x40] sm:$0xff]
        %v256 = vld [vmem:[%s184 + $0x48] sm:$0xff]
        %v257 = vld [vmem:[%s184 + $0x50] sm:$0xff]
        %v258 = vld [vmem:[%s184 + $0x58] sm:$0xff]
        %v259 = vld [vmem:[%s184 + $0x60] sm:$0xff]
        %v260 = vld [vmem:[%s184 + $0x68] sm:$0xff]
        %v261 = vld [vmem:[%s184 + $0x70] sm:$0xff]
        %v262 = vld [vmem:[%s184 + $0x78] sm:$0xff]
        %v263 = vadd.f32 %v247, %v248
        %264 = vadd.xlane.f32.xlu0 %v263
        %v265 = vpop.xlane.xlu0 %264
        %v266 = vadd.f32 %v249, %v250
        %267 = vadd.xlane.f32.xlu0 %v266
        %v268 = vpop.xlane.xlu0 %267
        %v269 = vadd.f32 %v251, %v252
        %270 = vadd.xlane.f32.xlu0 %v269
        %v271 = vpop.xlane.xlu0 %270
        %v272 = vadd.f32 %v253, %v254
        %273 = vadd.xlane.f32.xlu0 %v272
        %v274 = vpop.xlane.xlu0 %273
        %v275 = vadd.f32 %v255, %v256
        %276 = vadd.xlane.f32.xlu0 %v275
        %v277 = vpop.xlane.xlu0 %276
        %v278 = vadd.f32 %v257, %v258
        %279 = vadd.xlane.f32.xlu0 %v278
        %v280 = vpop.xlane.xlu0 %279
        %v281 = vadd.f32 %v259, %v260
        %282 = vadd.xlane.f32.xlu0 %v281
        %v283 = vpop.xlane.xlu0 %282
        %v284 = vadd.f32 %v261, %v262
        %285 = vadd.xlane.f32.xlu0 %v284
        %v286 = vpop.xlane.xlu0 %285
        %v287 = vld [vmem:[%s225] sm:$0xff]
        %v288 = vld [vmem:[%s225 + $0x8] sm:$0xff]
        %v289 = vld [vmem:[%s225 + $0x10] sm:$0xff]
        %v290 = vld [vmem:[%s225 + $0x18] sm:$0xff]
        %v291 = vld [vmem:[%s225 + $0x20] sm:$0xff]
        %v292 = vld [vmem:[%s225 + $0x28] sm:$0xff]
        %v293 = vld [vmem:[%s225 + $0x30] sm:$0xff]
        %v294 = vld [vmem:[%s225 + $0x38] sm:$0xff]
        %v295 = vadd.f32 %v287, %v265
        %v296 = vadd.f32 %v288, %v268
        %v297 = vadd.f32 %v289, %v271
        %v298 = vadd.f32 %v290, %v274
        %v299 = vadd.f32 %v291, %v277
        %v300 = vadd.f32 %v292, %v280
        %v301 = vadd.f32 %v293, %v283
        %v302 = vadd.f32 %v294, %v286
        %vm303 = vcmask 7168
        %304 = vst.msk [vmem:[%s225] sm:$0xff] %vm303, %v295
        %305 = vst.msk [vmem:[%s225 + $0x8] sm:$0xff] %vm303, %v296
        %306 = vst.msk [vmem:[%s225 + $0x10] sm:$0xff] %vm303, %v297
        %307 = vst.msk [vmem:[%s225 + $0x18] sm:$0xff] %vm303, %v298
        %308 = vst.msk [vmem:[%s225 + $0x20] sm:$0xff] %vm303, %v299
        %309 = vst.msk [vmem:[%s225 + $0x28] sm:$0xff] %vm303, %v300
        %310 = vst.msk [vmem:[%s225 + $0x30] sm:$0xff] %vm303, %v301
        %311 = vst.msk [vmem:[%s225 + $0x38] sm:$0xff] %vm303, %v302
        %v312 = vld [vmem:[%s193] sm:$0xff]
        %v313 = vld [vmem:[%s193 + $0x8] sm:$0xff]
        %v314 = vld [vmem:[%s193 + $0x10] sm:$0xff]
        %v315 = vld [vmem:[%s193 + $0x18] sm:$0xff]
        %v316 = vld [vmem:[%s193 + $0x20] sm:$0xff]
        %v317 = vld [vmem:[%s193 + $0x28] sm:$0xff]
        %v318 = vld [vmem:[%s193 + $0x30] sm:$0xff]
        %v319 = vld [vmem:[%s193 + $0x38] sm:$0xff]
        %v320 = vld [vmem:[%s193 + $0x40] sm:$0xff]
        %v321 = vld [vmem:[%s193 + $0x48] sm:$0xff]
        %v322 = vld [vmem:[%s193 + $0x50] sm:$0xff]
        %v323 = vld [vmem:[%s193 + $0x58] sm:$0xff]
        %v324 = vld [vmem:[%s193 + $0x60] sm:$0xff]
        %v325 = vld [vmem:[%s193 + $0x68] sm:$0xff]
        %v326 = vld [vmem:[%s193 + $0x70] sm:$0xff]
        %v327 = vld [vmem:[%s193 + $0x78] sm:$0xff]
        %v328 = vadd.f32 %v312, %v313
        %329 = vadd.xlane.f32.xlu0 %v328
        %v330 = vpop.xlane.xlu0 %329
        %v331 = vadd.f32 %v314, %v315
        %332 = vadd.xlane.f32.xlu0 %v331
        %v333 = vpop.xlane.xlu0 %332
        %v334 = vadd.f32 %v316, %v317
        %335 = vadd.xlane.f32.xlu0 %v334
        %v336 = vpop.xlane.xlu0 %335
        %v337 = vadd.f32 %v318, %v319
        %338 = vadd.xlane.f32.xlu0 %v337
        %v339 = vpop.xlane.xlu0 %338
        %v340 = vadd.f32 %v320, %v321
        %341 = vadd.xlane.f32.xlu0 %v340
        %v342 = vpop.xlane.xlu0 %341
        %v343 = vadd.f32 %v322, %v323
        %344 = vadd.xlane.f32.xlu0 %v343
        %v345 = vpop.xlane.xlu0 %344
        %v346 = vadd.f32 %v324, %v325
        %347 = vadd.xlane.f32.xlu0 %v346
        %v348 = vpop.xlane.xlu0 %347
        %v349 = vadd.f32 %v326, %v327
        %350 = vadd.xlane.f32.xlu0 %v349
        %v351 = vpop.xlane.xlu0 %350
        %v352 = vld [vmem:[%s225 + $0x40] sm:$0xff]
        %v353 = vld [vmem:[%s225 + $0x48] sm:$0xff]
        %v354 = vld [vmem:[%s225 + $0x50] sm:$0xff]
        %v355 = vld [vmem:[%s225 + $0x58] sm:$0xff]
        %v356 = vld [vmem:[%s225 + $0x60] sm:$0xff]
        %v357 = vld [vmem:[%s225 + $0x68] sm:$0xff]
        %v358 = vld [vmem:[%s225 + $0x70] sm:$0xff]
        %v359 = vld [vmem:[%s225 + $0x78] sm:$0xff]
        %v360 = vadd.f32 %v352, %v330
        %v361 = vadd.f32 %v353, %v333
        %v362 = vadd.f32 %v354, %v336
        %v363 = vadd.f32 %v355, %v339
        %v364 = vadd.f32 %v356, %v342
        %v365 = vadd.f32 %v357, %v345
        %v366 = vadd.f32 %v358, %v348
        %v367 = vadd.f32 %v359, %v351
        %368 = vst.msk [vmem:[%s225 + $0x40] sm:$0xff] %vm303, %v360
        %369 = vst.msk [vmem:[%s225 + $0x48] sm:$0xff] %vm303, %v361
        %370 = vst.msk [vmem:[%s225 + $0x50] sm:$0xff] %vm303, %v362
        %371 = vst.msk [vmem:[%s225 + $0x58] sm:$0xff] %vm303, %v363
        %372 = vst.msk [vmem:[%s225 + $0x60] sm:$0xff] %vm303, %v364
        %373 = vst.msk [vmem:[%s225 + $0x68] sm:$0xff] %vm303, %v365
        %374 = vst.msk [vmem:[%s225 + $0x70] sm:$0xff] %vm303, %v366
        %375 = vst.msk [vmem:[%s225 + $0x78] sm:$0xff] %vm303, %v367
        %p376 = scmp.lt.s32.totalorder %s23, 1
        %s377 = scalar_select %p376, %s23, 1
        %s378 = smul.addr %s377, 16
        %s379 = smul.addr %s378, 8
        %s380 = scalar_lea.vmem %s2, %s379
        // Predicated region
        $region41: #{tpu_custom_call.1} parent=27 // pred_check
          %p381 = pneg %p105
        $region42: #{tpu_custom_call.1} parent=27 // pred_check_branch
          %383 = sbr.rel (%p381) target = $region44
        $region43: #{tpu_custom_call.1} parent=27 // pred_region
          _
        $region44: #{tpu_custom_call.1} parent=27 // pred_fallthru
          _
      $region28: #{tpu_custom_call.1} parent=5 // pred_fallthru
        _
      %p384 = scmp.le.s32.totalorder 2, %s14
      // Predicated region
      $region45: #{tpu_custom_call.1} parent=5 // pred_check
        %p385 = pneg %p384
      $region46: #{tpu_custom_call.1} parent=5 // pred_check_branch
        %387 = sbr.rel (%p385) target = $region48
      $region47: #{tpu_custom_call.1} parent=5 // pred_region
        %s388 = ssub.s32 %s14, 2
        // Predicated region
        $region49: #{tpu_custom_call.1} parent=47 // pred_check
          %p389 = pneg %p111
        $region50: #{tpu_custom_call.1} parent=47 // pred_check_branch
          %391 = sbr.rel (%p389) target = $region52
        $region51: #{tpu_custom_call.1} parent=47 // pred_region
          %p392 = scmp.lt.s32.totalorder %s25, 1
          %s393 = scalar_select %p392, %s25, 1
          %s394 = smul.addr %s393, 16
          %s395 = smul.addr %s394, 8
          %s396 = scalar_lea.vmem %s2, %s395
        $region52: #{tpu_custom_call.1} parent=47 // pred_fallthru
          _
      $region48: #{tpu_custom_call.1} parent=5 // pred_fallthru
        _
    $region6: #{tpu_custom_call.1} parent=1 // loop_footer
      %s18 = sadd.s32 1, %s14
    $region7: #{tpu_custom_call.1} parent=1 // loop_footer_branch
      %13 = sbr.rel target = $region3
    $region8: #{tpu_custom_call.1} parent=1 // loop_exit
      _
    %397 = vsyncpa [#allocation3], 1
    %s398 = scalar_lea.sflag [#allocation3], 1
    %399 = vsyncpa %s398, 1
    %400 = vsyncpa [#allocation5], 1
    %s401 = scalar_lea.sflag [#allocation5], 1
    %402 = vsyncpa %s401, 1

</llo_original>
